<compile_context>
chip_gen: v5e
topology: v5e:2x2
jax: 0.10.0
libtpu: 0.0.40
codegen_flags: <defaults>
</compile_context>

<pallas_src>
import functools

import jax
import jax.numpy as jnp
from jax.experimental import pallas as pl
from jax.experimental.pallas import tpu as pltpu

LANE = 128
SUBLANE = 8


def _round_up(x, m):
    return (x + m - 1) // m * m


def _tpu_vmem_cap():
    """VMEM capacity in bytes (falls back to the v7x 64 MiB floor)."""
    try:
        return int(pltpu.get_tpu_info().vmem_capacity_bytes)
    except Exception:
        return 64 << 20


def _nbytes(shape, dtype):
    n = 1
    for d in shape:
        n *= d
    return n * jnp.dtype(dtype).itemsize


def _vmem_limit_bytes(streamed, resident=(), scratch=(), cap=64 << 20):
    """Streamed blocks are double-buffered; resident/scratch are single."""
    total = sum(2 * _nbytes(s, d) for s, d in streamed)
    total += sum(_nbytes(s, d) for s, d in resident)
    total += sum(_nbytes(s, d) for s, d in scratch)
    total = int(total * 1.3) + (2 << 20)  # headroom for compiler temporaries
    return max(4 << 20, min(total, int(cap * 0.9)))


def _select_tiles(n):
    """Row/K tiles for the propagation passes, sized per TPU generation."""
    n8 = _round_up(n, SUBLANE)
    cap = _tpu_vmem_cap()
    big_vmem = cap >= (96 << 20)          # v5e/v6e: 128 MiB; v7x: 64 MiB
    max_tk = 1024 if big_vmem else 512
    max_tm = 512 if big_vmem else 256
    # Padding unit: power of two, >=16 (bf16 packs 16 rows per vreg), <=max_tk.
    p = max(16, min(max_tk, pl.next_power_of_2(n8)))
    np_ = _round_up(n8, p)
    tk = p
    tm = min(max_tm, p)
    return np_, tm, tk, cap


# --------------------------- kernels ---------------------------------------


def linear_kernel(x_ref, w_ref, o_ref):
    """o = x @ w, f32 accumulation, bf16 output (per row block)."""
    o_ref[...] = jnp.dot(
        x_ref[...], w_ref[...], preferred_element_type=jnp.float32
    ).astype(o_ref.dtype)


def prop_relu_linear_kernel(a_ref, xw_ref, w2_ref, o_ref, acc_ref):
    """K-tiled: acc += A_blk @ XW1_blk; at last k: o = relu(acc) @ W2."""
    k = pl.program_id(1)

    @pl.when(k == 0)
    def _():
        acc_ref[...] = jnp.zeros_like(acc_ref)

    acc_ref[...] += jnp.dot(
        a_ref[...], xw_ref[...], preferred_element_type=jnp.float32
    )

    @pl.when(k == pl.num_programs(1) - 1)
    def _():
        h2 = jnp.maximum(acc_ref[...], 0.0).astype(w2_ref.dtype)
        o_ref[...] = jnp.dot(
            h2, w2_ref[...], preferred_element_type=jnp.float32
        ).astype(o_ref.dtype)


def prop_softmax_kernel(a_ref, hw_ref, h3_ref, out_ref, acc_ref, *, num_classes):
    """K-tiled: acc += A_blk @ HW2_blk; at last k: h3 = acc, out = softmax."""
    k = pl.program_id(1)

    @pl.when(k == 0)
    def _():
        acc_ref[...] = jnp.zeros_like(acc_ref)

    acc_ref[...] += jnp.dot(
        a_ref[...], hw_ref[...], preferred_element_type=jnp.float32
    )

    @pl.when(k == pl.num_programs(1) - 1)
    def _():
        h3 = acc_ref[...]
        h3_ref[...] = h3.astype(h3_ref.dtype)
        # Mask padded class lanes out of the softmax; exact division so that
        # every row sums to 1 (matches torch.nn.Softmax).
        col = jax.lax.broadcasted_iota(jnp.int32, h3.shape, 1)
        valid = col < num_classes
        m = jnp.max(jnp.where(valid, h3, -jnp.inf), axis=1, keepdims=True)
        e = jnp.where(valid, jnp.exp(h3 - m), 0.0)
        denom = jnp.sum(e, axis=1, keepdims=True)
        out_ref[...] = (e / denom).astype(out_ref.dtype)


# --------------------------- glue (plain JAX) -------------------------------


def build_normalized_adjacency_padded(edge_index, num_nodes, padded, dtype):
    """A_hat = D^{-1/2}(A+I)D^{-1/2}, scattered directly into the padded
    (padded, padded) buffer (PyG gcn_norm convention: A_hat[col, row] = norm).
    """
    row, col = edge_index[0], edge_index[1]
    loop = jnp.arange(num_nodes, dtype=edge_index.dtype)
    row = jnp.concatenate([row, loop])
    col = jnp.concatenate([col, loop])
    ew = jnp.ones(row.shape[0], dtype=jnp.float32)
    deg = jnp.zeros((num_nodes,), jnp.float32).at[col].add(ew)
    dis = jnp.where(deg > 0, 1.0 / jnp.sqrt(deg), 0.0)
    norm = dis[row] * dis[col]
    a = jnp.zeros((padded, padded), jnp.float32).at[col, row].add(norm)
    return a.astype(dtype)


def build_normalized_adjacency(edge_index, num_nodes):
    return build_normalized_adjacency_padded(
        edge_index, num_nodes, num_nodes, jnp.float32
    )


# --------------------------- forward wrapper --------------------------------


def gcn_forward(x, edge_index, batch_index, w1, w2):
    # batch_index is accepted for API parity with the PyTorch module but is
    # unused in its forward pass.
    del batch_index
    n, f = x.shape
    h = w1.shape[1]
    c = w2.shape[1]

    # Lane-dense padding of feature / hidden / class dims.
    fp = _round_up(f, LANE)
    hp = _round_up(h, LANE)
    cp = _round_up(c, LANE)

    np_, tm, tk, vmem_cap = _select_tiles(n)
    tm1 = tk  # pass-1 uses the larger tile (its footprint is tiny)

    bf16 = jnp.bfloat16
    a_p = build_normalized_adjacency_padded(edge_index, n, np_, bf16)
    x_p = jnp.zeros((np_, fp), bf16).at[:n, :f].set(x.astype(bf16))
    w1_p = jnp.zeros((fp, hp), bf16).at[:f, :h].set(w1.astype(bf16))
    w2_p = jnp.zeros((hp, cp), bf16).at[:h, :c].set(w2.astype(bf16))

    # ---- pass 1: XW1 = X @ W1 (row-tiled linear) -------------------------
    xw1 = pl.pallas_call(
        linear_kernel,
        out_shape=jax.ShapeDtypeStruct((np_, hp), bf16),
        grid=(np_ // tm1,),
        in_specs=[
            pl.BlockSpec((tm1, fp), lambda i: (i, 0)),
            pl.BlockSpec((fp, hp), lambda i: (0, 0)),
        ],
        out_specs=pl.BlockSpec((tm1, hp), lambda i: (i, 0)),
        compiler_params=pltpu.CompilerParams(
            dimension_semantics=("parallel",),
            vmem_limit_bytes=_vmem_limit_bytes(
                streamed=[((tm1, fp), bf16), ((tm1, hp), bf16)],
                resident=[((fp, hp), bf16)],
                cap=vmem_cap,
            ),
        ),
    )(x_p, w1_p)

    grid2 = (np_ // tm, np_ // tk)

    # ---- pass 2: HW2 = relu(A_hat @ XW1) @ W2 (row x K tiled) ------------
    hw2 = pl.pallas_call(
        prop_relu_linear_kernel,
        out_shape=jax.ShapeDtypeStruct((np_, cp), bf16),
        grid=grid2,
        in_specs=[
            pl.BlockSpec((tm, tk), lambda i, k: (i, k)),
            pl.BlockSpec((tk, hp), lambda i, k: (k, 0)),
            pl.BlockSpec((hp, cp), lambda i, k: (0, 0)),
        ],
        out_specs=pl.BlockSpec((tm, cp), lambda i, k: (i, 0)),
        scratch_shapes=[pltpu.VMEM((tm, hp), jnp.float32)],
        compiler_params=pltpu.CompilerParams(
            dimension_semantics=("parallel", "arbitrary"),
            vmem_limit_bytes=_vmem_limit_bytes(
                streamed=[((tm, tk), bf16), ((tk, hp), bf16), ((tm, cp), bf16)],
                resident=[((hp, cp), bf16)],
                scratch=[((tm, hp), jnp.float32)],
                cap=vmem_cap,
            ),
        ),
    )(a_p, xw1, w2_p)

    # ---- pass 3: h3 = A_hat @ HW2 ; out = softmax(h3) (row x K tiled) -----
    h3_p, out_p = pl.pallas_call(
        functools.partial(prop_softmax_kernel, num_classes=c),
        out_shape=(
            jax.ShapeDtypeStruct((np_, cp), jnp.float32),
            jax.ShapeDtypeStruct((np_, cp), jnp.float32),
        ),
        grid=grid2,
        in_specs=[
            pl.BlockSpec((tm, tk), lambda i, k: (i, k)),
            pl.BlockSpec((tk, cp), lambda i, k: (k, 0)),
        ],
        out_specs=(
            pl.BlockSpec((tm, cp), lambda i, k: (i, 0)),
            pl.BlockSpec((tm, cp), lambda i, k: (i, 0)),
        ),
        scratch_shapes=[pltpu.VMEM((tm, cp), jnp.float32)],
        compiler_params=pltpu.CompilerParams(
            dimension_semantics=("parallel", "arbitrary"),
            vmem_limit_bytes=_vmem_limit_bytes(
                streamed=[((tm, tk), bf16), ((tk, cp), bf16),
                          ((tm, cp), jnp.float32), ((tm, cp), jnp.float32)],
                scratch=[((tm, cp), jnp.float32)],
                cap=vmem_cap,
            ),
        ),
    )(a_p, hw2)

    # Strip node / class padding.
    return h3_p[:n, :c], out_p[:n, :c]


def gcn_reference(x, edge_index, w1, w2):
    a_hat = build_normalized_adjacency(edge_index, x.shape[0])
    h1 = a_hat @ (x @ w1)
    h2 = jnp.maximum(h1, 0.0)
    h3 = a_hat @ (h2 @ w2)
    return h3, jax.nn.softmax(h3, axis=1)


if __name__ == "__main__":
    key = jax.random.PRNGKey(0)

    num_nodes = 8
    input_size = 16
    hidden_size = 32
    class_size = 4

    k_x, k_w1, k_w2 = jax.random.split(key, 3)

    # Node features [N, F]
    x = jax.random.normal(k_x, (num_nodes, input_size), dtype=jnp.float32)

    # Deterministic small graph: undirected ring (both directions per edge)
    src = jnp.arange(num_nodes, dtype=jnp.int32)
    dst = (src + 1) % num_nodes
    edge_index = jnp.stack(
        [jnp.concatenate([src, dst]), jnp.concatenate([dst, src])], axis=0
    )

    # Single graph in the batch
    batch_index = jnp.zeros((num_nodes,), dtype=jnp.int32)

    # Glorot-uniform-ish deterministic weights, stored [in, out]
    lim1 = (6.0 / (input_size + hidden_size)) ** 0.5
    w1 = jax.random.uniform(
        k_w1, (input_size, hidden_size), jnp.float32, -lim1, lim1
    )
    lim2 = (6.0 / (hidden_size + class_size)) ** 0.5
    w2 = jax.random.uniform(
        k_w2, (hidden_size, class_size), jnp.float32, -lim2, lim2
    )

    h3, out = gcn_forward(x, edge_index, batch_index, w1, w2)
    jax.block_until_ready((h3, out))

    # Shape checks
    assert h3.shape == (num_nodes, class_size)
    assert out.shape == (num_nodes, class_size)

    # Softmax rows must sum to 1 (exact division in-kernel)
    assert bool(jnp.allclose(jnp.sum(out, axis=1), 1.0, atol=1e-5))

    # Match f32 reference within bf16 tolerance
    h3_ref, out_ref = gcn_reference(x, edge_index, w1, w2)
    assert bool(jnp.allclose(h3, h3_ref, atol=5e-2, rtol=5e-2))
    assert bool(jnp.allclose(out, out_ref, atol=5e-2, rtol=5e-2))

    print("KERNEL_OK")
</pallas_src>

<mosaic_0001>
module attributes {stable_mosaic.version = 11 : i64} {
  func.func @linear_kernel(%arg0: i32, %arg1: memref<16x128xbf16, #tpu.memory_space<vmem>>, %arg2: memref<128x128xbf16, #tpu.memory_space<vmem>>, %arg3: memref<16x128xbf16, #tpu.memory_space<vmem>>) attributes {dimension_semantics = [#tpu.dimension_semantics<parallel>], iteration_bounds = array<i64: 1>, scalar_prefetch = 0 : i64, scratch_operands = 0 : i64, tpu.core_type = #tpu.core_type<tc>, window_params = [{transform_indices = @transform_0, window_bounds = array<i64: 16, 128>}, {pipeline_mode = #tpu.pipeline_mode<synchronous>, transform_indices = @transform_1, window_bounds = array<i64: 128, 128>}, {transform_indices = @transform_2, window_bounds = array<i64: 16, 128>}]} {
    %c0 = arith.constant 0 : index
    %c0_0 = arith.constant 0 : index
    %0 = vector.load %arg1[%c0, %c0_0] : memref<16x128xbf16, #tpu.memory_space<vmem>>, vector<16x128xbf16>
    %c0_1 = arith.constant 0 : index
    %c0_2 = arith.constant 0 : index
    %1 = vector.load %arg2[%c0_1, %c0_2] : memref<128x128xbf16, #tpu.memory_space<vmem>>, vector<128x128xbf16>
    %cst = arith.constant dense<0.000000e+00> : vector<16x128xf32>
    %2 = tpu.matmul %0, %1, %cst {dimension_numbers = #tpu.dot_dimension_numbers<[1], [0], [0], [1], [0, 0, 1, 1], [], []>} : vector<16x128xbf16>, vector<128x128xbf16>, vector<16x128xf32> -> vector<16x128xf32>
    %3 = arith.truncf %2 : vector<16x128xf32> to vector<16x128xbf16>
    %c0_3 = arith.constant 0 : index
    %c0_4 = arith.constant 0 : index
    %4 = vector.load %arg3[%c0_3, %c0_4] : memref<16x128xbf16, #tpu.memory_space<vmem>>, vector<16x128xbf16>
    tpu.vector_store %arg3[%c0_3, %c0_4], %3 {strides = array<i32>} : memref<16x128xbf16, #tpu.memory_space<vmem>>, vector<16x128xbf16>,
    return
  }
  func.func @transform_0(%arg0: i32) -> (i32, i32) {
    %c0_i32 = arith.constant 0 : i32
    %c0_i32_0 = arith.constant 0 : i32
    return %arg0, %c0_i32 : i32, i32
  }
  func.func @transform_1(%arg0: i32) -> (i32, i32) {
    %c0_i32 = arith.constant 0 : i32
    %c0_i32_0 = arith.constant 0 : i32
    %c0_i32_1 = arith.constant 0 : i32
    return %c0_i32, %c0_i32_0 : i32, i32
  }
  func.func @transform_2(%arg0: i32) -> (i32, i32) {
    %c0_i32 = arith.constant 0 : i32
    %c0_i32_0 = arith.constant 0 : i32
    return %arg0, %c0_i32 : i32, i32
  }
}

</mosaic_0001>

<llo_original>
// kernel: tpu_custom_call.1
$region0: #{tpu_custom_call.1}
  #allocation0 [shape = 'u32[]', space=smem, size = 0x4, offset = 0x4, fixed_abs, tag = 'smem constant byte address 0x4 - core index']
  #allocation1 [shape = 'u32[72,128]{1,0:T(1,128)}', space=vmem, size = 0x9000, scoped, tag = 'internal scratch']
  %s0 = inlined_call_operand.hbm [shape: bf16[16,128], index: 0, kind: input, shape index: {}]
  %s1 = inlined_call_operand.hbm [shape: bf16[128,128], index: 1, kind: input, shape index: {}]
  %s2 = inlined_call_operand.hbm [shape: bf16[16,128], index: 2, kind: output, shape index: {}]
  %s3 = sld [smem:[#allocation0]]
  $region26: #{tpu_custom_call.1} parent=0
    _
  %s5 = ssub.s32 1, %s3
  %s6 = scalar_select 0, %s5, %s3
  $region1: #{tpu_custom_call.1} parent=0
    #allocation2 [shape = 'u8[4096]{0}', space=vmem, size = 0x1000, scoped, tag = 'input window, operand 0, single buffered']
    #allocation3 [shape = 's32[1]{0}', space=sflag, size = 0x4, scoped, tag = 'scoped memory for tpu_custom_call.1']
    #allocation4 [shape = 's32[1]{0}', space=sflag, size = 0x4, scoped, tag = 'scoped memory for tpu_custom_call.1']
    #allocation5 [shape = 'u8[32768]{0}', space=vmem, size = 0x8000, scoped, tag = 'input window, operand 1, single buffered']
    #allocation6 [shape = 's32[1]{0}', space=sflag, size = 0x4, scoped, tag = 'scoped memory for tpu_custom_call.1']
    #allocation7 [shape = 'u8[4096]{0}', space=vmem, size = 0x1000, scoped, tag = 'output window, operand 0, single buffered']
    %7 = vsyncpa [#allocation3], 0
    %8 = vsyncpa [#allocation6], 0
    %9 = vsyncpa [#allocation4], 0
    // Predicated region
    $region2: #{tpu_custom_call.1} parent=1 // pred_check
      _
    $region3: #{tpu_custom_call.1} parent=1 // pred_check_branch
      %11 = sbr.rel (0) target = $region5
    $region4: #{tpu_custom_call.1} parent=1 // pred_region
      %13 = vsyncadd [#allocation3], 0
      %s14 = sshll.u32 %s0, 4
      %s15 = int_to_ptr.hbm [resolvable:$true] %s14
      %s16 = sshll.u32 [#allocation2], 4
      %s17 = int_to_ptr.vmem [resolvable:$true] %s16
      %22 = dma.hbm_to_vmem [thread:$0]  %s15, 128, %s17, [#allocation3], 64, 64, 4
    $region5: #{tpu_custom_call.1} parent=1 // pred_fallthru
      _
    // Predicated region
    $region6: #{tpu_custom_call.1} parent=1 // pred_check
      _
    $region7: #{tpu_custom_call.1} parent=1 // pred_check_branch
      %24 = sbr.rel (0) target = $region9
    $region8: #{tpu_custom_call.1} parent=1 // pred_region
      %26 = vsyncadd [#allocation6], 0
      %s27 = sshll.u32 %s1, 4
      %s28 = int_to_ptr.hbm [resolvable:$true] %s27
      %s29 = sshll.u32 [#allocation5], 4
      %s30 = int_to_ptr.vmem [resolvable:$true] %s29
      %35 = dma.hbm_to_vmem [thread:$0]  %s28, 1024, %s30, [#allocation6], 64, 64, 4
    $region9: #{tpu_custom_call.1} parent=1 // pred_fallthru
      _
    // Predicated region
    $region10: #{tpu_custom_call.1} parent=1 // pred_check
      _
    $region11: #{tpu_custom_call.1} parent=1 // pred_check_branch
      %37 = sbr.rel (0) target = $region13
    $region12: #{tpu_custom_call.1} parent=1 // pred_region
      %39 = dma.done [#allocation3], 128
    $region13: #{tpu_custom_call.1} parent=1 // pred_fallthru
      _
    // Predicated region
    $region14: #{tpu_custom_call.1} parent=1 // pred_check
      _
    $region15: #{tpu_custom_call.1} parent=1 // pred_check_branch
      %41 = sbr.rel (0) target = $region17
    $region16: #{tpu_custom_call.1} parent=1 // pred_region
      %43 = dma.done [#allocation6], 1024
    $region17: #{tpu_custom_call.1} parent=1 // pred_fallthru
      _
    %v44 = vld [vmem:[#allocation2] sm:$0xf]
    %v45 = vld [vmem:[#allocation2 + $0x4] sm:$0xf]
    %v46 = vld [vmem:[#allocation5] sm:$0xf]
    %v47 = vld [vmem:[#allocation5 + $0x4] sm:$0xf]
    %v48 = vld [vmem:[#allocation5 + $0x8] sm:$0xf]
    %v49 = vld [vmem:[#allocation5 + $0xc] sm:$0xf]
    %v50 = vld [vmem:[#allocation5 + $0x10] sm:$0xf]
    %v51 = vld [vmem:[#allocation5 + $0x14] sm:$0xf]
    %v52 = vld [vmem:[#allocation5 + $0x18] sm:$0xf]
    %v53 = vld [vmem:[#allocation5 + $0x1c] sm:$0xf]
    %v54 = vld [vmem:[#allocation5 + $0x20] sm:$0xf]
    %v55 = vld [vmem:[#allocation5 + $0x24] sm:$0xf]
    %v56 = vld [vmem:[#allocation5 + $0x28] sm:$0xf]
    %v57 = vld [vmem:[#allocation5 + $0x2c] sm:$0xf]
    %v58 = vld [vmem:[#allocation5 + $0x30] sm:$0xf]
    %v59 = vld [vmem:[#allocation5 + $0x34] sm:$0xf]
    %v60 = vld [vmem:[#allocation5 + $0x38] sm:$0xf]
    %v61 = vld [vmem:[#allocation5 + $0x3c] sm:$0xf]
    %v64 = vunpack.c.l.b16 %v44
    %v65 = vunpack.c.l.b16 %v45
    %v66 = vpack.c.b16 %v65, %v64
    %v84 = vunpack.c.l.b16 %v46
    %v85 = vunpack.c.l.b16 %v47
    %v86 = vunpack.c.l.b16 %v48
    %v87 = vunpack.c.l.b16 %v49
    %v88 = vunpack.c.l.b16 %v50
    %v89 = vunpack.c.l.b16 %v51
    %v90 = vunpack.c.l.b16 %v52
    %v91 = vunpack.c.l.b16 %v53
    %v92 = vunpack.c.l.b16 %v54
    %v93 = vunpack.c.l.b16 %v55
    %v94 = vunpack.c.l.b16 %v56
    %v95 = vunpack.c.l.b16 %v57
    %v96 = vunpack.c.l.b16 %v58
    %v97 = vunpack.c.l.b16 %v59
    %v98 = vunpack.c.l.b16 %v60
    %v99 = vunpack.c.l.b16 %v61
    %v100 = vpack.c.b16 %v85, %v84
    %v101 = vpack.c.b16 %v87, %v86
    %v102 = vpack.c.b16 %v89, %v88
    %v103 = vpack.c.b16 %v91, %v90
    %v104 = vpack.c.b16 %v93, %v92
    %v105 = vpack.c.b16 %v95, %v94
    %v106 = vpack.c.b16 %v97, %v96
    %v107 = vpack.c.b16 %v99, %v98
    %116 = vmatpush.bf16.msra.mxu0 %v107
    %117 = vmatpush.bf16.msra.mxu0 %v106
    %118 = vmatpush.bf16.msra.mxu0 %v105
    %119 = vmatpush.bf16.msra.mxu0 %v104
    %120 = vmatpush.bf16.msra.mxu0 %v103
    %121 = vmatpush.bf16.msra.mxu0 %v102
    %122 = vmatpush.bf16.msra.mxu0 %v101
    %123 = vmatpush.bf16.msra.mxu0 %v100
    %124 = vmatmul.bf16.gmra.mxu0 %v66
    %v125 = vpop.f32.mrf.mxu0
    %v126 = vadd.f32 0.0, %v125
    %v127 = vpop.f32.mrf.mxu0
    %v128 = vadd.f32 0.0, %v127
    %129 = vdwg.mxu0
    %v130 = vpack.c.bf16 %v126, %v126
    %v131 = vpack.c.bf16 %v128, %v128
    %132 = vst [vmem:[#allocation7] sm:$0xf] %v130
    %133 = vst [vmem:[#allocation7 + $0x4] sm:$0xf] %v131
    // Predicated region
    $region18: #{tpu_custom_call.1} parent=1 // pred_check
      _
    $region19: #{tpu_custom_call.1} parent=1 // pred_check_branch
      %135 = sbr.rel (0) target = $region21
    $region20: #{tpu_custom_call.1} parent=1 // pred_region
      %137 = vsyncadd [#allocation4], 0
      %s138 = sshll.u32 [#allocation7], 4
      %s139 = int_to_ptr.vmem [resolvable:$true] %s138
      %s140 = sshll.u32 %s2, 4
      %s141 = int_to_ptr.hbm [resolvable:$true] %s140
      %146 = dma.vmem_to_hbm [thread:$0]  %s139, 128, %s141, [#allocation4], 64, 64, 4
    $region21: #{tpu_custom_call.1} parent=1 // pred_fallthru
      _
    // Predicated region
    $region22: #{tpu_custom_call.1} parent=1 // pred_check
      _
    $region23: #{tpu_custom_call.1} parent=1 // pred_check_branch
      %148 = sbr.rel (0) target = $region25
    $region24: #{tpu_custom_call.1} parent=1 // pred_region
      %150 = dma.done [#allocation4], 128
    $region25: #{tpu_custom_call.1} parent=1 // pred_fallthru
      _
    %151 = vsyncpa [#allocation3], 1
    %152 = vsyncpa [#allocation6], 1
    %153 = vsyncpa [#allocation4], 1

</llo_original>
